<compile_context>
chip_gen: v6e
topology: v6e:2x2x1
jax: 0.10.0
libtpu: 0.0.40
codegen_flags: <defaults>
</compile_context>

<pallas_src>
import functools

import jax
import jax.numpy as jnp
from jax.experimental import pallas as pl
from jax.experimental.pallas import tpu as pltpu


# ----------------------------------------------------------------------------
# Kernels
# ----------------------------------------------------------------------------
# NOTE: Both kernels rely on the k (4H reduction) grid axis being the
# innermost, sequentially executed ("arbitrary") axis; do not reorder the grid
# or mark k as "parallel".

def _bilinear_ffn_kernel_inplace(x_ref, w1_ref, w2_ref, w3_ref, o_ref):
    # x_ref:  (tm, H)   token tile (original dtype; cast in-kernel)
    # w1_ref: (H, tn)   W1 chunk (compute dtype, e.g. bf16)
    # w2_ref: (H, tn)   W2 chunk
    # w3_ref: (tn, H)   W3 chunk
    # o_ref:  (tm, H)   f32 output tile, used directly as the accumulator
    k = pl.program_id(1)

    @pl.when(k == 0)
    def _():
        o_ref[...] = jnp.zeros_like(o_ref)

    x = x_ref[...].astype(w1_ref.dtype)          # cheap VPU cast, hidden by MXU
    h1 = jnp.dot(x, w1_ref[...], preferred_element_type=jnp.float32)
    h2 = jnp.dot(x, w2_ref[...], preferred_element_type=jnp.float32)
    gated = (h1 * h2).astype(w3_ref.dtype)       # gate in f32, feed MXU narrow
    o_ref[...] += jnp.dot(gated, w3_ref[...], preferred_element_type=jnp.float32)


def _bilinear_ffn_kernel_acc(x_ref, w1_ref, w2_ref, w3_ref, o_ref, acc_ref):
    # Same as above but with an f32 scratch accumulator for non-f32 outputs.
    k = pl.program_id(1)

    @pl.when(k == 0)
    def _():
        acc_ref[...] = jnp.zeros_like(acc_ref)

    x = x_ref[...].astype(w1_ref.dtype)
    h1 = jnp.dot(x, w1_ref[...], preferred_element_type=jnp.float32)
    h2 = jnp.dot(x, w2_ref[...], preferred_element_type=jnp.float32)
    gated = (h1 * h2).astype(w3_ref.dtype)
    acc_ref[...] += jnp.dot(gated, w3_ref[...], preferred_element_type=jnp.float32)

    @pl.when(k == pl.num_programs(1) - 1)
    def _():
        o_ref[...] = acc_ref[...].astype(o_ref.dtype)


# ----------------------------------------------------------------------------
# Generation-aware tile / VMEM selection
# ----------------------------------------------------------------------------

def _chip_defaults():
    """(tm_max, tn_max, tn_step, vmem_fallback_bytes, want_tiles)."""
    kind = ""
    try:
        kind = jax.devices()[0].device_kind.lower()
    except Exception:
        pass
    if "v5 lite" in kind or "v5e" in kind or "v5litepod" in kind:
        # v5e: ~240 flops/byte needed -> tm=256 already ~compute-bound.
        return 256, 512, 128, 128 << 20, 1
    if "v6" in kind or "trillium" in kind:
        # v6e: ~640 flops/byte -> large tm; 128 MiB VMEM available.
        return 1024, 512, 256, 128 << 20, 1
    if "v7" in kind:
        # v7x: ~311 flops/byte, 64 MiB/TC, 2 TensorCores -> smaller tn, >=2 tiles.
        return 512, 256, 256, 64 << 20, 2
    # Unknown generation: conservative.
    return 512, 256, 256, 64 << 20, 1


def _vmem_cap_bytes(fallback_bytes):
    """~0.85 of physical VMEM (leave headroom for compiler internal scratch)."""
    try:
        return int(pltpu.get_tpu_info().vmem_capacity_bytes * 0.85)
    except Exception:
        return int(fallback_bytes * 0.85)


def _pick_tm(M, tm_max, want_tiles=1):
    """Token-tile size; prefer no padding; prefer 256/128/16-aligned tiles."""
    if M <= tm_max:
        # Megacore (v7x): split a single big tile so both TensorCores get work.
        if want_tiles >= 2 and M >= 256 and M % 2 == 0 and (M // 2) % 16 == 0:
            return M // 2, M
        return M, M
    for step in (256, 128, 16):
        t = (tm_max // step) * step
        while t >= step:
            if M % t == 0:
                return t, M
            t -= step
    # Rare fallback: pad M up to a multiple of a 128-aligned tile.
    t = max((tm_max // 128) * 128, 128)
    return t, ((M + t - 1) // t) * t


def _pick_tn(H4, tn_max, tn_step):
    """4H chunk: prefer a multiple of tn_step (MXU N dim) that divides H4."""
    if H4 <= tn_max:
        return H4
    for step in (tn_step, 128):
        t = (tn_max // step) * step
        while t >= step:
            if H4 % t == 0:
                return t
            t -= step
    # TODO(synk): for huge awkward H4 this keeps the chunk fully resident; pad
    # H4 to a multiple of 128 at load time if that ever exceeds VMEM.
    return H4


# ----------------------------------------------------------------------------
# Wrapper
# ----------------------------------------------------------------------------

def prepare_params(w1, w2, w3, compute_dtype=jnp.bfloat16):
    """One-time (load-time) cast of the weights to the MXU feed dtype."""
    return (w1.astype(compute_dtype),
            w2.astype(compute_dtype),
            w3.astype(compute_dtype))


@functools.partial(jax.jit, static_argnames=("tm", "tn", "m_pad", "vmem_cap"))
def _bilinear_ffn(x, w1, w2, w3, *, tm, tn, m_pad, vmem_cap):
    B, S, H = x.shape
    H4 = w1.shape[1]
    M = B * S
    assert H4 % tn == 0 and m_pad % tm == 0

    x2d = x.reshape(M, H)
    if m_pad != M:
        x2d = jnp.pad(x2d, ((0, m_pad - M), (0, 0)))

    xb = jnp.dtype(x.dtype).itemsize
    wb = jnp.dtype(w1.dtype).itemsize
    ob = jnp.dtype(x.dtype).itemsize

    # VMEM working set (double-buffered pipeline inputs/outputs + intermediates).
    work = 2 * (tm * H * xb            # x tile
                + 2 * H * tn * wb      # W1_k + W2_k chunks
                + tn * H * wb          # W3_k chunk
                + tm * H * ob)         # output tile
    work += tm * tn * (4 + 4 + 2)      # h1, h2 (f32) + gated (narrow)
    work += tm * H * (2 + 4)           # in-kernel x cast + acc scratch slack
    vmem_limit = int(min(max(work * 1.3, 16 << 20), vmem_cap))

    use_inplace = jnp.dtype(x.dtype) == jnp.dtype(jnp.float32)
    if use_inplace:
        kernel = _bilinear_ffn_kernel_inplace
        scratch = []
    else:
        kernel = _bilinear_ffn_kernel_acc
        scratch = [pltpu.VMEM((tm, H), jnp.float32)]

    cost = pl.CostEstimate(
        flops=6 * m_pad * H * H4,                      # three M*H*H4 matmuls
        transcendentals=0,
        bytes_accessed=m_pad * H * (xb + ob) + 3 * H * H4 * wb,
    )

    out = pl.pallas_call(
        kernel,
        out_shape=jax.ShapeDtypeStruct((m_pad, H), x.dtype),
        grid_spec=pltpu.PrefetchScalarGridSpec(
            num_scalar_prefetch=0,
            grid=(m_pad // tm, H4 // tn),              # (token tiles, 4H chunks)
            in_specs=[
                pl.BlockSpec((tm, H), lambda i, k: (i, 0)),   # x tile
                pl.BlockSpec((H, tn), lambda i, k: (0, k)),   # W1_k
                pl.BlockSpec((H, tn), lambda i, k: (0, k)),   # W2_k
                pl.BlockSpec((tn, H), lambda i, k: (k, 0)),   # W3_k
            ],
            out_specs=pl.BlockSpec((tm, H), lambda i, k: (i, 0)),
            scratch_shapes=scratch,
        ),
        compiler_params=pltpu.CompilerParams(
            dimension_semantics=("parallel", "arbitrary"),
            vmem_limit_bytes=vmem_limit,
        ),
        cost_estimate=cost,
    )(x2d, w1, w2, w3)

    return out[:M].reshape(B, S, H)


def bilinear_feed_forward(x, w1, w2, w3):
    """x: [B, S, H]; w1, w2: [H, 4H]; w3: [4H, H]  ->  [B, S, H].

    Pass weights already cast to the compute dtype (see prepare_params) to
    avoid per-call weight casts.
    """
    B, S, H = x.shape
    H4 = w1.shape[1]
    M = B * S

    tm_max, tn_max, tn_step, vmem_fb, want_tiles = _chip_defaults()
    vmem_cap = _vmem_cap_bytes(vmem_fb)
    tm, m_pad = _pick_tm(M, tm_max, want_tiles)
    tn = _pick_tn(H4, tn_max, tn_step)

    return _bilinear_ffn(x, w1, w2, w3, tm=tm, tn=tn, m_pad=m_pad,
                         vmem_cap=vmem_cap)


# ----------------------------------------------------------------------------
# Init + references + smoke test
# ----------------------------------------------------------------------------

def init_params(key, hidden_size, dtype=jnp.float32):
    """Shapes match the PyTorch module; stored as (in, out) so y = x @ W."""
    k1, k2, k3 = jax.random.split(key, 3)
    h, h4 = hidden_size, hidden_size * 4
    w1 = jax.random.uniform(k1, (h, h4), dtype, -1.0, 1.0) / jnp.sqrt(h).astype(dtype)
    w2 = jax.random.uniform(k2, (h, h4), dtype, -1.0, 1.0) / jnp.sqrt(h).astype(dtype)
    w3 = jax.random.uniform(k3, (h4, h), dtype, -1.0, 1.0) / jnp.sqrt(h4).astype(dtype)
    return w1, w2, w3


def reference_bf16(x, w1, w2, w3, compute_dtype=jnp.bfloat16):
    """Same math as the kernel (narrow MXU feeds, f32 accumulation)."""
    xc = x.astype(compute_dtype)
    h1 = jnp.dot(xc, w1.astype(compute_dtype), preferred_element_type=jnp.float32)
    h2 = jnp.dot(xc, w2.astype(compute_dtype), preferred_element_type=jnp.float32)
    g = (h1 * h2).astype(compute_dtype)
    out = jnp.dot(g, w3.astype(compute_dtype), preferred_element_type=jnp.float32)
    return out.astype(x.dtype)


def reference_f32(x, w1, w2, w3):
    return ((x @ w1) * (x @ w2)) @ w3


if __name__ == "__main__":
    B, S, H = 2, 8, 32  # batch=2, seq=8, hidden=32 -> intermediate 4H=128
    key = jax.random.PRNGKey(0)
    kx, kp = jax.random.split(key)
    x = jax.random.normal(kx, (B, S, H), jnp.float32)
    w1, w2, w3 = init_params(kp, H)

    # One-time weight cast ("parameter load"), not per-call.
    w1c, w2c, w3c = prepare_params(w1, w2, w3, compute_dtype=jnp.bfloat16)

    out = bilinear_feed_forward(x, w1c, w2c, w3c)
    out = jax.block_until_ready(out)

    ref_bf16 = reference_bf16(x, w1, w2, w3)
    ref_f32 = reference_f32(x, w1, w2, w3)

    assert out.shape == (B, S, H), out.shape
    assert jnp.allclose(out, ref_bf16, atol=1e-2, rtol=1e-2), float(
        jnp.max(jnp.abs(out - ref_bf16)))
    assert jnp.allclose(out, ref_f32, atol=5e-2, rtol=5e-2), float(
        jnp.max(jnp.abs(out - ref_f32)))

    print("KERNEL_OK")
</pallas_src>

<mosaic_0001>
module attributes {stable_mosaic.version = 11 : i64} {
  func.func @_bilinear_ffn_kernel_inplace(%arg0: i32, %arg1: i32, %arg2: memref<16x32xf32, #tpu.memory_space<vmem>>, %arg3: memref<32x128xbf16, #tpu.memory_space<vmem>>, %arg4: memref<32x128xbf16, #tpu.memory_space<vmem>>, %arg5: memref<128x32xbf16, #tpu.memory_space<vmem>>, %arg6: memref<16x32xf32, #tpu.memory_space<vmem>>) attributes {dimension_semantics = [#tpu.dimension_semantics<parallel>, #tpu.dimension_semantics<arbitrary>], iteration_bounds = array<i64: 1, 1>, scalar_prefetch = 0 : i64, scratch_operands = 0 : i64, tpu.core_type = #tpu.core_type<tc>, window_params = [{transform_indices = @transform_0, window_bounds = array<i64: 16, 32>}, {transform_indices = @transform_1, window_bounds = array<i64: 32, 128>}, {transform_indices = @transform_2, window_bounds = array<i64: 32, 128>}, {transform_indices = @transform_3, window_bounds = array<i64: 128, 32>}, {transform_indices = @transform_4, window_bounds = array<i64: 16, 32>}]} {
    %c0_i32 = arith.constant 0 : i32
    %0 = arith.cmpi eq, %arg1, %c0_i32 : i32
    %1 = arith.extui %0 : i1 to i32
    %c0_i32_0 = arith.constant 0 : i32
    %2 = arith.cmpi ne, %1, %c0_i32_0 : i32
    scf.if %2 {
      %cst_14 = arith.constant 0.000000e+00 : f32
      %16 = vector.broadcast %cst_14 : f32 to vector<16x32xf32>
      %c0_15 = arith.constant 0 : index
      %c0_16 = arith.constant 0 : index
      %17 = vector.load %arg6[%c0_15, %c0_16] : memref<16x32xf32, #tpu.memory_space<vmem>>, vector<16x32xf32>
      tpu.vector_store %arg6[%c0_15, %c0_16], %16 {strides = array<i32>} : memref<16x32xf32, #tpu.memory_space<vmem>>, vector<16x32xf32>,
    } else {
    }
    %c0 = arith.constant 0 : index
    %c0_1 = arith.constant 0 : index
    %3 = vector.load %arg2[%c0, %c0_1] : memref<16x32xf32, #tpu.memory_space<vmem>>, vector<16x32xf32>
    %4 = arith.truncf %3 : vector<16x32xf32> to vector<16x32xbf16>
    %c0_2 = arith.constant 0 : index
    %c0_3 = arith.constant 0 : index
    %5 = vector.load %arg3[%c0_2, %c0_3] : memref<32x128xbf16, #tpu.memory_space<vmem>>, vector<32x128xbf16>
    %cst = arith.constant dense<0.000000e+00> : vector<16x128xf32>
    %6 = tpu.matmul %4, %5, %cst {dimension_numbers = #tpu.dot_dimension_numbers<[1], [0], [0], [1], [0, 0, 1, 1], [], []>} : vector<16x32xbf16>, vector<32x128xbf16>, vector<16x128xf32> -> vector<16x128xf32>
    %c0_4 = arith.constant 0 : index
    %c0_5 = arith.constant 0 : index
    %7 = vector.load %arg4[%c0_4, %c0_5] : memref<32x128xbf16, #tpu.memory_space<vmem>>, vector<32x128xbf16>
    %cst_6 = arith.constant dense<0.000000e+00> : vector<16x128xf32>
    %8 = tpu.matmul %4, %7, %cst_6 {dimension_numbers = #tpu.dot_dimension_numbers<[1], [0], [0], [1], [0, 0, 1, 1], [], []>} : vector<16x32xbf16>, vector<32x128xbf16>, vector<16x128xf32> -> vector<16x128xf32>
    %9 = arith.mulf %6, %8 : vector<16x128xf32>
    %10 = arith.truncf %9 : vector<16x128xf32> to vector<16x128xbf16>
    %c0_7 = arith.constant 0 : index
    %c0_8 = arith.constant 0 : index
    %11 = vector.load %arg6[%c0_7, %c0_8] : memref<16x32xf32, #tpu.memory_space<vmem>>, vector<16x32xf32>
    %c0_9 = arith.constant 0 : index
    %c0_10 = arith.constant 0 : index
    %12 = vector.load %arg5[%c0_9, %c0_10] : memref<128x32xbf16, #tpu.memory_space<vmem>>, vector<128x32xbf16>
    %cst_11 = arith.constant dense<0.000000e+00> : vector<16x32xf32>
    %13 = tpu.matmul %10, %12, %cst_11 {dimension_numbers = #tpu.dot_dimension_numbers<[1], [0], [0], [1], [0, 0, 1, 1], [], []>} : vector<16x128xbf16>, vector<128x32xbf16>, vector<16x32xf32> -> vector<16x32xf32>
    %14 = arith.addf %11, %13 : vector<16x32xf32>
    %c0_12 = arith.constant 0 : index
    %c0_13 = arith.constant 0 : index
    %15 = vector.load %arg6[%c0_12, %c0_13] : memref<16x32xf32, #tpu.memory_space<vmem>>, vector<16x32xf32>
    tpu.vector_store %arg6[%c0_12, %c0_13], %14 {strides = array<i32>} : memref<16x32xf32, #tpu.memory_space<vmem>>, vector<16x32xf32>,
    return
  }
  func.func @transform_0(%arg0: i32, %arg1: i32) -> (i32, i32) {
    %c0_i32 = arith.constant 0 : i32
    %c0_i32_0 = arith.constant 0 : i32
    return %arg0, %c0_i32 : i32, i32
  }
  func.func @transform_1(%arg0: i32, %arg1: i32) -> (i32, i32) {
    %c0_i32 = arith.constant 0 : i32
    %c0_i32_0 = arith.constant 0 : i32
    return %c0_i32, %arg1 : i32, i32
  }
  func.func @transform_2(%arg0: i32, %arg1: i32) -> (i32, i32) {
    %c0_i32 = arith.constant 0 : i32
    %c0_i32_0 = arith.constant 0 : i32
    return %c0_i32, %arg1 : i32, i32
  }
  func.func @transform_3(%arg0: i32, %arg1: i32) -> (i32, i32) {
    %c0_i32 = arith.constant 0 : i32
    %c0_i32_0 = arith.constant 0 : i32
    return %arg1, %c0_i32 : i32, i32
  }
  func.func @transform_4(%arg0: i32, %arg1: i32) -> (i32, i32) {
    %c0_i32 = arith.constant 0 : i32
    %c0_i32_0 = arith.constant 0 : i32
    return %arg0, %c0_i32 : i32, i32
  }
}

</mosaic_0001>

<llo_original>
// kernel: _bilinear_ffn.1
$region0: #{_bilinear_ffn.1}
  #allocation0 [shape = 'u32[]', space=smem, size = 0x4, offset = 0x4, fixed_abs, tag = 'smem constant byte address 0x4 - core index']
  #allocation1 [shape = 'u32[144,128]{1,0:T(1,128)}', space=vmem, size = 0x12000, scoped, tag = 'internal scratch']
  %s0 = inlined_call_operand.vmem [shape: f32[16,32], index: 0, kind: input, shape index: {}]
  %s1 = inlined_call_operand.vmem [shape: bf16[32,128], index: 1, kind: input, shape index: {}]
  %s2 = inlined_call_operand.vmem [shape: bf16[32,128], index: 2, kind: input, shape index: {}]
  %s3 = inlined_call_operand.vmem [shape: bf16[128,32], index: 3, kind: input, shape index: {}]
  %s4 = inlined_call_operand.hbm [shape: f32[16,32], index: 4, kind: output, shape index: {}]
  %s5 = sld [smem:[#allocation0]]
  $region30: #{_bilinear_ffn.1} parent=0
    _
  %s7 = ssub.s32 1, %s5
  %s8 = scalar_select 0, %s7, %s5
  $region1: #{_bilinear_ffn.1} parent=0
    #allocation2 [shape = 'u8[8192]{0}', space=vmem, size = 0x2000, scoped, tag = 'output window, operand 0, single buffered']
    #allocation3 [shape = 's32[1]{0}', space=sflag, size = 0x4, scoped, tag = 'scoped memory for _bilinear_ffn.1']
    %9 = vsyncpa [#allocation3], 0
    // Predicated region
    $region2: #{_bilinear_ffn.1} parent=1 // pred_check
      _
    $region3: #{_bilinear_ffn.1} parent=1 // pred_check_branch
      %11 = sbr.rel (0) target = $region5
    $region4: #{_bilinear_ffn.1} parent=1 // pred_region
      _
    $region5: #{_bilinear_ffn.1} parent=1 // pred_fallthru
      _
    // Predicated region
    $region6: #{_bilinear_ffn.1} parent=1 // pred_check
      _
    $region7: #{_bilinear_ffn.1} parent=1 // pred_check_branch
      %13 = sbr.rel (0) target = $region9
    $region8: #{_bilinear_ffn.1} parent=1 // pred_region
      _
    $region9: #{_bilinear_ffn.1} parent=1 // pred_fallthru
      _
    // Predicated region
    $region10: #{_bilinear_ffn.1} parent=1 // pred_check
      _
    $region11: #{_bilinear_ffn.1} parent=1 // pred_check_branch
      %15 = sbr.rel (0) target = $region13
    $region12: #{_bilinear_ffn.1} parent=1 // pred_region
      _
    $region13: #{_bilinear_ffn.1} parent=1 // pred_fallthru
      _
    // Predicated region
    $region14: #{_bilinear_ffn.1} parent=1 // pred_check
      _
    $region15: #{_bilinear_ffn.1} parent=1 // pred_check_branch
      %17 = sbr.rel (0) target = $region17
    $region16: #{_bilinear_ffn.1} parent=1 // pred_region
      _
    $region17: #{_bilinear_ffn.1} parent=1 // pred_fallthru
      _
    %p19 = scmp.eq.s32.totalorder 0, 0
    // Predicated region
    $region18: #{_bilinear_ffn.1} parent=1 // pred_check
      %p20 = pneg %p19
    $region19: #{_bilinear_ffn.1} parent=1 // pred_check_branch
      %22 = sbr.rel (%p20) target = $region21
    $region20: #{_bilinear_ffn.1} parent=1 // pred_region
      %vm23 = vcmask 261120
      %24 = vst.msk [vmem:[#allocation2] sm:$0xff] %vm23, 0.0
      %25 = vst.msk [vmem:[#allocation2 + $0x8] sm:$0xff] %vm23, 0.0
    $region21: #{_bilinear_ffn.1} parent=1 // pred_fallthru
      _
    %v26 = vld [vmem:[%s0] sm:$0xff]
    %v27 = vld [vmem:[%s0 + $0x8] sm:$0xff]
    %v28 = vpack.c.bf16 %v27, %v26
    %v29 = vld [vmem:[%s1] sm:$0xf]
    %v30 = vld [vmem:[%s1 + $0x4] sm:$0xf]
    %v31 = vld [vmem:[%s1 + $0x8] sm:$0xf]
    %v32 = vld [vmem:[%s1 + $0xc] sm:$0xf]
    %v37 = vunpack.c.l.b16 %v29
    %v38 = vunpack.c.l.b16 %v30
    %v39 = vunpack.c.l.b16 %v31
    %v40 = vunpack.c.l.b16 %v32
    %v41 = vpack.c.b16 %v38, %v37
    %v42 = vpack.c.b16 %v40, %v39
    %vm45 = vcmask 261120
    %v47 = vsel %vm45, %v28, 0
    %49 = vmatprep.subr.bf16.mxu0 0
    %50 = vmatpush1.bf16.msra.mxu0 0
    %51 = vmatprep.subr.bf16.mxu0 0
    %52 = vmatpush1.bf16.msra.mxu0 0
    %53 = vmatprep.subr.bf16.mxu0 0
    %54 = vmatpush1.bf16.msra.mxu0 0
    %55 = vmatprep.subr.bf16.mxu0 0
    %56 = vmatpush1.bf16.msra.mxu0 0
    %57 = vmatprep.subr.bf16.mxu0 0
    %58 = vmatpush1.bf16.msra.mxu0 0
    %59 = vmatprep.subr.bf16.mxu0 0
    %60 = vmatpush1.bf16.msra.mxu0 0
    %61 = vmatprep.subr.bf16.mxu0 0
    %62 = vmatpush1.bf16.msra.mxu0 %v42
    %63 = vmatprep.subr.bf16.mxu0 0
    %64 = vmatpush1.bf16.msra.mxu0 %v41
    %65 = vmatprep.subr.bf16.mxu0 0
    %66 = vmatpush2.bf16.msra.mxu0 0
    %67 = vmatprep.subr.bf16.mxu0 0
    %68 = vmatpush2.bf16.msra.mxu0 0
    %69 = vmatprep.subr.bf16.mxu0 0
    %70 = vmatpush2.bf16.msra.mxu0 0
    %71 = vmatprep.subr.bf16.mxu0 0
    %72 = vmatpush2.bf16.msra.mxu0 0
    %73 = vmatprep.subr.bf16.mxu0 0
    %74 = vmatpush2.bf16.msra.mxu0 0
    %75 = vmatprep.subr.bf16.mxu0 0
    %76 = vmatpush2.bf16.msra.mxu0 0
    %77 = vmatprep.subr.bf16.mxu0 0
    %78 = vmatpush2.bf16.msra.mxu0 0
    %79 = vmatprep.subr.bf16.mxu0 0
    %80 = vmatpush2.bf16.msra.mxu0 0
    %81 = vmatprep.mubr.bf16.mxu0 0
    %82 = vmatmul.mubr.bf16.gmra.mxu0 %v47
    %v83 = vpop.f32.mrf.mxu0
    %v84 = vadd.f32 0.0, %v83
    %v85 = vpop.f32.mrf.mxu0
    %v86 = vpop.f32.mrf.mxu0
    %v87 = vadd.f32 0.0, %v86
    %v88 = vpop.f32.mrf.mxu0
    %89 = vdwg.mxu0
    %v90 = vld [vmem:[%s2] sm:$0xf]
    %v91 = vld [vmem:[%s2 + $0x4] sm:$0xf]
    %v92 = vld [vmem:[%s2 + $0x8] sm:$0xf]
    %v93 = vld [vmem:[%s2 + $0xc] sm:$0xf]
    %v98 = vunpack.c.l.b16 %v90
    %v99 = vunpack.c.l.b16 %v91
    %v100 = vunpack.c.l.b16 %v92
    %v101 = vunpack.c.l.b16 %v93
    %v102 = vpack.c.b16 %v99, %v98
    %v103 = vpack.c.b16 %v101, %v100
    %106 = vmatprep.subr.bf16.mxu0 0
    %107 = vmatpush1.bf16.msra.mxu0 0
    %108 = vmatprep.subr.bf16.mxu0 0
    %109 = vmatpush1.bf16.msra.mxu0 0
    %110 = vmatprep.subr.bf16.mxu0 0
    %111 = vmatpush1.bf16.msra.mxu0 0
    %112 = vmatprep.subr.bf16.mxu0 0
    %113 = vmatpush1.bf16.msra.mxu0 0
    %114 = vmatprep.subr.bf16.mxu0 0
    %115 = vmatpush1.bf16.msra.mxu0 0
    %116 = vmatprep.subr.bf16.mxu0 0
    %117 = vmatpush1.bf16.msra.mxu0 0
    %118 = vmatprep.subr.bf16.mxu0 0
    %119 = vmatpush1.bf16.msra.mxu0 %v103
    %120 = vmatprep.subr.bf16.mxu0 0
    %121 = vmatpush1.bf16.msra.mxu0 %v102
    %122 = vmatprep.subr.bf16.mxu0 0
    %123 = vmatpush2.bf16.msra.mxu0 0
    %124 = vmatprep.subr.bf16.mxu0 0
    %125 = vmatpush2.bf16.msra.mxu0 0
    %126 = vmatprep.subr.bf16.mxu0 0
    %127 = vmatpush2.bf16.msra.mxu0 0
    %128 = vmatprep.subr.bf16.mxu0 0
    %129 = vmatpush2.bf16.msra.mxu0 0
    %130 = vmatprep.subr.bf16.mxu0 0
    %131 = vmatpush2.bf16.msra.mxu0 0
    %132 = vmatprep.subr.bf16.mxu0 0
    %133 = vmatpush2.bf16.msra.mxu0 0
    %134 = vmatprep.subr.bf16.mxu0 0
    %135 = vmatpush2.bf16.msra.mxu0 0
    %136 = vmatprep.subr.bf16.mxu0 0
    %137 = vmatpush2.bf16.msra.mxu0 0
    %138 = vmatprep.mubr.bf16.mxu0 0
    %139 = vmatmul.mubr.bf16.gmra.mxu0 %v47
    %v140 = vpop.f32.mrf.mxu0
    %v141 = vadd.f32 0.0, %v140
    %v142 = vpop.f32.mrf.mxu0
    %v143 = vpop.f32.mrf.mxu0
    %v144 = vadd.f32 0.0, %v143
    %v145 = vpop.f32.mrf.mxu0
    %146 = vdwg.mxu0
    %v147 = vmul.f32 %v84, %v141
    %v148 = vmul.f32 %v87, %v144
    %v149 = vpack.c.bf16 %v148, %v147
    %v150 = vld [vmem:[#allocation2] sm:$0xff]
    %v151 = vld [vmem:[#allocation2 + $0x8] sm:$0xff]
    %v152 = vld [vmem:[%s3] sm:$0xf]
    %v153 = vld [vmem:[%s3 + $0x4] sm:$0xf]
    %v154 = vld [vmem:[%s3 + $0x8] sm:$0xf]
    %v155 = vld [vmem:[%s3 + $0xc] sm:$0xf]
    %v156 = vld [vmem:[%s3 + $0x10] sm:$0xf]
    %v157 = vld [vmem:[%s3 + $0x14] sm:$0xf]
    %v158 = vld [vmem:[%s3 + $0x18] sm:$0xf]
    %v159 = vld [vmem:[%s3 + $0x1c] sm:$0xf]
    %v160 = vld [vmem:[%s3 + $0x20] sm:$0xf]
    %v161 = vld [vmem:[%s3 + $0x24] sm:$0xf]
    %v162 = vld [vmem:[%s3 + $0x28] sm:$0xf]
    %v163 = vld [vmem:[%s3 + $0x2c] sm:$0xf]
    %v164 = vld [vmem:[%s3 + $0x30] sm:$0xf]
    %v165 = vld [vmem:[%s3 + $0x34] sm:$0xf]
    %v166 = vld [vmem:[%s3 + $0x38] sm:$0xf]
    %v167 = vld [vmem:[%s3 + $0x3c] sm:$0xf]
    %v184 = vunpack.c.l.b16 %v152
    %v185 = vunpack.c.l.b16 %v153
    %v186 = vunpack.c.l.b16 %v154
    %v187 = vunpack.c.l.b16 %v155
    %v188 = vunpack.c.l.b16 %v156
    %v189 = vunpack.c.l.b16 %v157
    %v190 = vunpack.c.l.b16 %v158
    %v191 = vunpack.c.l.b16 %v159
    %v192 = vunpack.c.l.b16 %v160
    %v193 = vunpack.c.l.b16 %v161
    %v194 = vunpack.c.l.b16 %v162
    %v195 = vunpack.c.l.b16 %v163
    %v196 = vunpack.c.l.b16 %v164
    %v197 = vunpack.c.l.b16 %v165
    %v198 = vunpack.c.l.b16 %v166
    %v199 = vunpack.c.l.b16 %v167
    %v200 = vpack.c.b16 %v185, %v184
    %v201 = vpack.c.b16 %v187, %v186
    %v202 = vpack.c.b16 %v189, %v188
    %v203 = vpack.c.b16 %v191, %v190
    %v204 = vpack.c.b16 %v193, %v192
    %v205 = vpack.c.b16 %v195, %v194
    %v206 = vpack.c.b16 %v197, %v196
    %v207 = vpack.c.b16 %v199, %v198
    %216 = vmatprep.subr.bf16.mxu0 0
    %217 = vmatpush1.bf16.msra.mxu0 %v207
    %218 = vmatprep.subr.bf16.mxu0 0
    %219 = vmatpush1.bf16.msra.mxu0 %v206
    %220 = vmatprep.subr.bf16.mxu0 0
    %221 = vmatpush1.bf16.msra.mxu0 %v205
    %222 = vmatprep.subr.bf16.mxu0 0
    %223 = vmatpush1.bf16.msra.mxu0 %v204
    %224 = vmatprep.subr.bf16.mxu0 0
    %225 = vmatpush1.bf16.msra.mxu0 %v203
    %226 = vmatprep.subr.bf16.mxu0 0
    %227 = vmatpush1.bf16.msra.mxu0 %v202
    %228 = vmatprep.subr.bf16.mxu0 0
    %229 = vmatpush1.bf16.msra.mxu0 %v201
    %230 = vmatprep.subr.bf16.mxu0 0
    %231 = vmatpush1.bf16.msra.mxu0 %v200
    %232 = vmatprep.subr.bf16.mxu0 0
    %233 = vmatpush2.bf16.msra.mxu0 0
    %234 = vmatprep.subr.bf16.mxu0 0
    %235 = vmatpush2.bf16.msra.mxu0 0
    %236 = vmatprep.subr.bf16.mxu0 0
    %237 = vmatpush2.bf16.msra.mxu0 0
    %238 = vmatprep.subr.bf16.mxu0 0
    %239 = vmatpush2.bf16.msra.mxu0 0
    %240 = vmatprep.subr.bf16.mxu0 0
    %241 = vmatpush2.bf16.msra.mxu0 0
    %242 = vmatprep.subr.bf16.mxu0 0
    %243 = vmatpush2.bf16.msra.mxu0 0
    %244 = vmatprep.subr.bf16.mxu0 0
    %245 = vmatpush2.bf16.msra.mxu0 0
    %246 = vmatprep.subr.bf16.mxu0 0
    %247 = vmatpush2.bf16.msra.mxu0 0
    %248 = vmatprep.mubr.bf16.mxu0 0
    %249 = vmatmul.mubr.bf16.gmra.mxu0 %v149
    %v250 = vpop.f32.mrf.mxu0
    %v251 = vadd.f32 0.0, %v250
    %v252 = vpop.f32.mrf.mxu0
    %v253 = vpop.f32.mrf.mxu0
    %v254 = vadd.f32 0.0, %v253
    %v255 = vpop.f32.mrf.mxu0
    %256 = vdwg.mxu0
    %v257 = vadd.f32 %v150, %v251
    %v258 = vadd.f32 %v151, %v254
    %259 = vst.msk [vmem:[#allocation2] sm:$0xff] %vm45, %v257
    %260 = vst.msk [vmem:[#allocation2 + $0x8] sm:$0xff] %vm45, %v258
    // Predicated region
    $region22: #{_bilinear_ffn.1} parent=1 // pred_check
      _
    $region23: #{_bilinear_ffn.1} parent=1 // pred_check_branch
      %262 = sbr.rel (0) target = $region25
    $region24: #{_bilinear_ffn.1} parent=1 // pred_region
      %s264 = ssub.s32 256, 256
      %265 = vsyncadd [#allocation3], %s264
      %s266 = sshll.u32 [#allocation2], 4
      %s267 = int_to_ptr.vmem [resolvable:$true] %s266
      %272 = dma.vmem_to_hbm [thread:$0]  %s267, 256, %s4, [#allocation3], 128, 128, 8
    $region25: #{_bilinear_ffn.1} parent=1 // pred_fallthru
      _
    // Predicated region
    $region26: #{_bilinear_ffn.1} parent=1 // pred_check
      _
    $region27: #{_bilinear_ffn.1} parent=1 // pred_check_branch
      %274 = sbr.rel (0) target = $region29
    $region28: #{_bilinear_ffn.1} parent=1 // pred_region
      %275 = dma.done [#allocation3], 256
    $region29: #{_bilinear_ffn.1} parent=1 // pred_fallthru
      _
    %276 = vsyncpa [#allocation3], 1

</llo_original>
